<compile_context>
chip_gen: v7x
topology: tpu7x:2x2x1
jax: 0.10.0
libtpu: 0.0.40
codegen_flags: <defaults>
</compile_context>

<pallas_src>
import numpy as np
import jax
import jax.numpy as jnp
from jax.experimental import pallas as pl
from jax.experimental.pallas import tpu as pltpu

IN_BRANCHES = 5            # xy(2), scale(2), rot(1), opacity(1), feature(F)
PARAMS_PER_BRANCH = 8      # W1, b1, ln1_g, ln1_b, W2, b2, ln2_g, ln2_b
LN_EPS = 1e-5              # torch.nn.LayerNorm default
_SEL_COLS = 128            # lane-padded column count of the group-indicator matrix
_VMEM_LIMIT_BYTES = 48 * 1024 * 1024


def _round_up(x, m):
    return ((x + m - 1) // m) * m


def _device_kind():
    try:
        return jax.devices()[0].device_kind.lower()
    except Exception:
        return ""


def _is_pre_v6(kind=None):
    kind = _device_kind() if kind is None else kind
    # v2/v3/v4/v5*: 128-wide MXU, no bf16 VPU -> f32 elementwise + batched 2nd layer.
    return any(v in kind for v in ("v2", "v3", "v4", "v5"))


# --------------------------------------------------------------------------- #
# GaussianLifter.forward: broadcast the learned parameters over the batch.
# --------------------------------------------------------------------------- #
def _bcast_kernel(p_ref, o_ref):
    o_ref[0] = p_ref[...]


def _batch_repeat(param, batch_size):
    n, c = param.shape
    return pl.pallas_call(
        _bcast_kernel,
        out_shape=jax.ShapeDtypeStruct((batch_size, n, c), param.dtype),
        grid=(batch_size,),
        in_specs=[pl.BlockSpec((n, c), lambda b: (0, 0))],
        out_specs=pl.BlockSpec((1, n, c), lambda b: (b, 0, 0)),
        compiler_params=pltpu.CompilerParams(dimension_semantics=("parallel",)),
    )(param)


def gaussian_lifter_forward_pallas(anchor_param, instance_feature_param, batch_size):
    """GaussianLifter.forward: returns (instance_feature, anchor) tiled over batch."""
    instance_feature = _batch_repeat(instance_feature_param, batch_size)
    anchor = _batch_repeat(anchor_param, batch_size)
    return instance_feature, anchor


# --------------------------------------------------------------------------- #
# Shared in-kernel helpers
# --------------------------------------------------------------------------- #
def _ln_rows(x_f32, gamma, beta, inv_d, ew_dtype):
    """LayerNorm over the last axis. One-pass variance (two back-to-back sums);
    mean/var/rsqrt in f32, scale/shift in `ew_dtype`."""
    s1 = jnp.sum(x_f32, axis=-1, keepdims=True)
    s2 = jnp.sum(x_f32 * x_f32, axis=-1, keepdims=True)
    mean = s1 * inv_d
    var = jnp.maximum(s2 * inv_d - mean * mean, 0.0)
    scale = jax.lax.rsqrt(var + LN_EPS)
    xn = ((x_f32 - mean) * scale).astype(ew_dtype)
    return xn * gamma + beta


def _ln_grouped(x_f32, sel, selt, gamma, beta, inv_d, ew_dtype):
    """Per-group LayerNorm over a lane-concatenated (tm, G*D) slab.
    Row sums / sum-of-squares AND the broadcast-back run on the MXU through a
    0/1 group-indicator matrix (sel: (G*D, SEL_COLS), selt: (SEL_COLS, G*D)),
    so no XLU cross-lane reductions are issued."""
    s1 = jnp.dot(x_f32, sel, preferred_element_type=jnp.float32)          # (tm, SEL)
    s2 = jnp.dot(x_f32 * x_f32, sel, preferred_element_type=jnp.float32)  # (tm, SEL)
    mean = s1 * inv_d
    var = jnp.maximum(s2 * inv_d - mean * mean, 0.0)
    scale = jax.lax.rsqrt(var + LN_EPS)
    mean_f = jnp.dot(mean, selt, preferred_element_type=jnp.float32)      # (tm, G*D)
    scale_f = jnp.dot(scale, selt, preferred_element_type=jnp.float32)    # (tm, G*D)
    xn = ((x_f32 - mean_f) * scale_f).astype(ew_dtype)
    return xn * gamma + beta


def _output_branch(summed, wout, vec_out, inv_d, ew_dtype):
    """output_fc branch: Linear -> ReLU -> LN -> Linear -> ReLU -> LN on (tm, D)."""
    w1 = wout[0]
    w2 = wout[1]
    h = jnp.dot(summed.astype(w1.dtype), w1, preferred_element_type=jnp.float32)
    h = jnp.maximum(h + vec_out[0:1, :], 0.0)
    h = _ln_rows(h, vec_out[1:2, :].astype(ew_dtype), vec_out[2:3, :].astype(ew_dtype),
                 inv_d, ew_dtype)
    h = jnp.dot(h.astype(w2.dtype), w2, preferred_element_type=jnp.float32)
    h = jnp.maximum(h + vec_out[3:4, :], 0.0)
    h = _ln_rows(h, vec_out[4:5, :].astype(ew_dtype), vec_out[5:6, :].astype(ew_dtype),
                 inv_d, ew_dtype)
    return h


# --------------------------------------------------------------------------- #
# Kernels
# --------------------------------------------------------------------------- #
def _make_kernel_blockdiag(embed_dim, ew_dtype):
    """v6e/v7x path: block-diagonal 2nd layer on a lane-aligned (tm, 5D) slab."""
    D = embed_dim
    inv_d = 1.0 / D

    def kernel(a_ref, w1s_ref, vec1_ref, w2_ref, sel_ref, selt_ref,
               wout_ref, vecout_ref, o_ref):
        a = a_ref[...]                                     # (tm, C)   f32
        w1s = w1s_ref[...]                                 # (C, 5D)   f32 block-diag
        h = jnp.dot(a, w1s, preferred_element_type=jnp.float32)   # (tm, 5D)

        v1 = vec1_ref[...]                                 # (6, 5D)   f32
        sel = sel_ref[...]                                 # (5D, 128) f32
        selt = selt_ref[...]                               # (128, 5D) f32

        h = jnp.maximum(h + v1[0:1, :], 0.0)
        h = _ln_grouped(h, sel, selt,
                        v1[1:2, :].astype(ew_dtype), v1[2:3, :].astype(ew_dtype),
                        inv_d, ew_dtype)

        w2 = w2_ref[...]                                   # (5D, 5D) block-diag
        h = jnp.dot(h.astype(w2.dtype), w2, preferred_element_type=jnp.float32)
        h = jnp.maximum(h + v1[3:4, :], 0.0)
        h = _ln_grouped(h, sel, selt,
                        v1[4:5, :].astype(ew_dtype), v1[5:6, :].astype(ew_dtype),
                        inv_d, ew_dtype)

        # Sum of the 5 lane-aligned branch slices -> (tm, D).
        summed = h[:, 0:D]
        for b in range(1, IN_BRANCHES):
            summed = summed + h[:, b * D:(b + 1) * D]

        out = _output_branch(summed, wout_ref[...], vecout_ref[...], inv_d, ew_dtype)
        o_ref[...] = out.astype(o_ref.dtype)

    return kernel


def _make_kernel_batched(embed_dim, ew_dtype):
    """v5e path: per-branch batched einsum second layer (128-wide MXU friendly)."""
    D = embed_dim
    inv_d = 1.0 / D

    def kernel(a_ref, w1s_ref, vec1_ref, w2s_ref, wout_ref, vecout_ref, o_ref):
        a = a_ref[...]                                     # (tm, C)   f32
        w1s = w1s_ref[...]                                 # (C, 5D)   f32 block-diag
        h_all = jnp.dot(a, w1s, preferred_element_type=jnp.float32)   # (tm, 5D)

        # Lane-aligned D-wide slices stacked to (5, tm, D).
        h5 = jnp.stack([h_all[:, b * D:(b + 1) * D] for b in range(IN_BRANCHES)],
                       axis=0)
        v1 = vec1_ref[...]                                 # (6, 5, 1, D) f32
        h5 = jnp.maximum(h5 + v1[0], 0.0)
        h5 = _ln_rows(h5, v1[1].astype(ew_dtype), v1[2].astype(ew_dtype),
                      inv_d, ew_dtype)

        w2s = w2s_ref[...]                                 # (5, D, D)
        h5 = jnp.einsum('bmk,bkn->bmn', h5.astype(w2s.dtype), w2s,
                        preferred_element_type=jnp.float32)
        h5 = jnp.maximum(h5 + v1[3], 0.0)
        h5 = _ln_rows(h5, v1[4].astype(ew_dtype), v1[5].astype(ew_dtype),
                      inv_d, ew_dtype)

        summed = jnp.sum(h5, axis=0)                       # (tm, D)
        out = _output_branch(summed, wout_ref[...], vecout_ref[...], inv_d, ew_dtype)
        o_ref[...] = out.astype(o_ref.dtype)

    return kernel


# --------------------------------------------------------------------------- #
# Host-side parameter packing (48 arrays -> a handful of stacked tensors)
# --------------------------------------------------------------------------- #
def pack_params(flat_params, *, embed_dim, feature_dim,
                matmul_dtype=jnp.bfloat16, blockdiag_layer2=True):
    D = embed_dim
    in_dims = [2, 2, 1, 1, feature_dim]        # xy, scale, rot, opacity, feature
    C = sum(in_dims)
    offs = [0]
    for k in in_dims:
        offs.append(offs[-1] + k)

    # Block-diagonal first-layer weight (kept in f32: K=C is one MXU pass anyway
    # and it avoids quantizing the raw anchor coordinates).
    w1s = jnp.zeros((C, IN_BRANCHES * D), jnp.float32)
    w2_list, vec_list = [], []
    for b in range(IN_BRANCHES):
        w1, b1, g1, be1, w2, b2, g2, be2 = flat_params[b * PARAMS_PER_BRANCH:
                                                       (b + 1) * PARAMS_PER_BRANCH]
        w1s = w1s.at[offs[b]:offs[b + 1], b * D:(b + 1) * D].set(w1)
        w2_list.append(w2)
        vec_list.append([b1.reshape(D), g1.reshape(D), be1.reshape(D),
                         b2.reshape(D), g2.reshape(D), be2.reshape(D)])

    base = IN_BRANCHES * PARAMS_PER_BRANCH
    w1o, b1o, g1o, be1o, w2o, b2o, g2o, be2o = flat_params[base:base + PARAMS_PER_BRANCH]
    w_out = jnp.stack([w1o, w2o], axis=0).astype(matmul_dtype)          # (2, D, D)
    vec_out = jnp.stack([b1o.reshape(D), g1o.reshape(D), be1o.reshape(D),
                         b2o.reshape(D), g2o.reshape(D), be2o.reshape(D)],
                        axis=0)                                          # (6, D)

    if blockdiag_layer2:
        w2bd = jnp.zeros((IN_BRANCHES * D, IN_BRANCHES * D), jnp.float32)
        for b in range(IN_BRANCHES):
            w2bd = w2bd.at[b * D:(b + 1) * D, b * D:(b + 1) * D].set(w2_list[b])
        # (6, 5D): rows = [b1 | g1 | be1 | b2 | g2 | be2] lane-concatenated per branch.
        vec1 = jnp.stack(
            [jnp.concatenate([vec_list[b][k] for b in range(IN_BRANCHES)])
             for k in range(6)], axis=0)
        # 0/1 group-indicator (lane -> branch), lane-padded to 128 columns,
        # used for the MXU-based grouped LayerNorm (sums + broadcast-back).
        lane_grp = jnp.arange(IN_BRANCHES * D) // D
        sel = (lane_grp[:, None] == jnp.arange(_SEL_COLS)[None, :]).astype(jnp.float32)
        selt = jnp.transpose(sel)
        return (w1s, vec1, w2bd.astype(matmul_dtype), sel, selt, w_out, vec_out)
    else:
        w2s = jnp.stack(w2_list, axis=0).astype(matmul_dtype)           # (5, D, D)
        vec1 = jnp.stack(
            [jnp.stack([vec_list[b][k] for b in range(IN_BRANCHES)], axis=0)[:, None, :]
             for k in range(6)], axis=0)                                # (6, 5, 1, D)
        return (w1s, vec1, w2s, w_out, vec_out)


# --------------------------------------------------------------------------- #
# Wrapper
# --------------------------------------------------------------------------- #
def anchor_encoder_pallas(anchor, flat_params, *, embed_dim, feature_dim,
                          tm=None, matmul_dtype=jnp.bfloat16,
                          ew_dtype=None, blockdiag_layer2=None):
    """anchor: (B, N, 6 + feature_dim) f32 -> (B, N, embed_dim) f32."""
    B, Nq, C = anchor.shape
    D = embed_dim
    assert C == 6 + feature_dim
    assert D % 128 == 0, "embed_dim must be a multiple of 128 (TPU lane tiling)"

    kind = _device_kind()
    if ew_dtype is None:
        ew_dtype = jnp.float32 if _is_pre_v6(kind) else jnp.bfloat16
    if blockdiag_layer2 is None:
        blockdiag_layer2 = not _is_pre_v6(kind)

    M = B * Nq
    # Row tile: multiple of 128; 512 default, 1024 for big M (amortize ~0.35us/step).
    if tm is None:
        tm = 1024 if M >= 8192 else 512
    tm = max(128, (int(tm) // 128) * 128)
    tm = min(tm, _round_up(M, 128))
    n_tiles = pl.cdiv(M, tm)
    if n_tiles > 1 and n_tiles % 2:
        n_tiles += 1          # keep the grid even so v7x's two cores stay balanced
    m_pad = n_tiles * tm

    a2 = anchor.reshape(M, C).astype(jnp.float32)
    if m_pad != M:
        a2 = jnp.pad(a2, ((0, m_pad - M), (0, 0)))   # padded rows are sliced off below

    packed = pack_params(flat_params, embed_dim=D, feature_dim=feature_dim,
                         matmul_dtype=matmul_dtype, blockdiag_layer2=blockdiag_layer2)
    kernel = (_make_kernel_blockdiag if blockdiag_layer2
              else _make_kernel_batched)(D, ew_dtype)

    def full(arr):
        return pl.BlockSpec(arr.shape, lambda i, _nd=arr.ndim: (0,) * _nd)

    out = pl.pallas_call(
        kernel,
        out_shape=jax.ShapeDtypeStruct((m_pad, D), jnp.float32),
        grid_spec=pltpu.PrefetchScalarGridSpec(
            num_scalar_prefetch=0,
            grid=(n_tiles,),
            in_specs=[pl.BlockSpec((tm, C), lambda i: (i, 0))]
                     + [full(arr) for arr in packed],
            out_specs=pl.BlockSpec((tm, D), lambda i: (i, 0)),
        ),
        compiler_params=pltpu.CompilerParams(
            dimension_semantics=("parallel",),
            vmem_limit_bytes=_VMEM_LIMIT_BYTES),
    )(a2, *packed)
    return out[:M].reshape(B, Nq, D)


# --------------------------------------------------------------------------- #
# Parameter init + pure-numpy (float64) reference
# --------------------------------------------------------------------------- #
def init_params(key, embed_dim, feature_dim):
    """Branch order: xy(2), scale(2), rot(1), opacity(1), feature(F), output(D)."""
    in_dims = [2, 2, 1, 1, feature_dim, embed_dim]
    flat = []
    for k_in in in_dims:
        key, k1, k2, k3, k4 = jax.random.split(key, 5)
        bound1 = 1.0 / float(np.sqrt(k_in))
        bound2 = 1.0 / float(np.sqrt(embed_dim))
        w1 = jax.random.uniform(k1, (k_in, embed_dim), jnp.float32, -bound1, bound1)
        b1 = jax.random.uniform(k2, (embed_dim,), jnp.float32, -bound1, bound1)
        w2 = jax.random.uniform(k3, (embed_dim, embed_dim), jnp.float32, -bound2, bound2)
        b2 = jax.random.uniform(k4, (embed_dim,), jnp.float32, -bound2, bound2)
        g1 = jnp.ones((embed_dim,), jnp.float32)
        be1 = jnp.zeros((embed_dim,), jnp.float32)
        g2 = jnp.ones((embed_dim,), jnp.float32)
        be2 = jnp.zeros((embed_dim,), jnp.float32)
        flat.extend([w1, b1, g1, be1, w2, b2, g2, be2])
    return flat


def anchor_encoder_ref_np(anchor, flat_params, *, feature_dim):
    """float64 numpy reference mirroring the PyTorch forward (precision-independent)."""
    a = np.asarray(anchor, np.float64)
    ps = [np.asarray(p, np.float64) for p in flat_params]

    def ln(x, g, b):
        mean = x.mean(-1, keepdims=True)
        var = ((x - mean) ** 2).mean(-1, keepdims=True)
        return (x - mean) / np.sqrt(var + LN_EPS) * g + b

    def branch(x, idx):
        w1, b1, g1, be1, w2, b2, g2, be2 = ps[idx * PARAMS_PER_BRANCH:
                                              (idx + 1) * PARAMS_PER_BRANCH]
        h = ln(np.maximum(x @ w1 + b1, 0.0), g1, be1)
        h = ln(np.maximum(h @ w2 + b2, 0.0), g2, be2)
        return h

    xy = branch(a[..., 0:2], 0)
    scale = branch(a[..., 2:4], 1)
    rot = branch(a[..., 4:5], 2)
    opa = branch(a[..., 5:6], 3)
    feat = branch(a[..., 6:6 + feature_dim], 4)
    return branch(xy + scale + rot + opa + feat, 5)


# TODO(synk): GaussianLifter.__init__ parameter construction / requires_grad flags are
# host-side setup, not kernel work; they are reproduced here only to build test inputs.

if __name__ == "__main__":
    embed_dim = 128
    feature_dim = 16
    num_anchor = 512
    B = 2
    C = 6 + feature_dim

    key = jax.random.PRNGKey(0)
    k_xy, k_scale, k_feat, k_if, k_params = jax.random.split(key, 5)

    def inv_sigmoid(x, eps=1e-3):
        x = jnp.clip(x, eps, 1.0 - eps)
        return jnp.log(x) - jnp.log1p(-x)

    # Anchor built the way GaussianLifter.__init__ does: [xy, scale, rot, opacity, feature].
    xy = inv_sigmoid(jax.random.uniform(k_xy, (num_anchor, 2), jnp.float32))
    scale = inv_sigmoid(jax.random.uniform(k_scale, (num_anchor, 2), jnp.float32))
    rots = jnp.zeros((num_anchor, 1), jnp.float32)
    opacity = inv_sigmoid(0.1 * jnp.ones((num_anchor, 1), jnp.float32))
    feature = jax.random.normal(k_feat, (num_anchor, feature_dim), jnp.float32)
    anchor_param = jnp.concatenate([xy, scale, rots, opacity, feature], axis=-1)
    instance_feature_param = 0.02 * jax.random.normal(
        k_if, (num_anchor, embed_dim), jnp.float32)

    # --- GaussianLifter.forward (batch broadcast) ------------------------------
    inst_b, anchor_b = gaussian_lifter_forward_pallas(anchor_param,
                                                      instance_feature_param, B)
    inst_b, anchor_b = jax.block_until_ready((inst_b, anchor_b))
    assert inst_b.shape == (B, num_anchor, embed_dim)
    assert anchor_b.shape == (B, num_anchor, C)
    assert np.array_equal(np.asarray(anchor_b),
                          np.broadcast_to(np.asarray(anchor_param), anchor_b.shape))
    assert np.array_equal(np.asarray(inst_b),
                          np.broadcast_to(np.asarray(instance_feature_param), inst_b.shape))

    # --- anchor-embedding MLP ---------------------------------------------------
    params = init_params(k_params, embed_dim, feature_dim)
    ref = anchor_encoder_ref_np(np.asarray(anchor_b), params, feature_dim=feature_dim)

    # 1) Exact-semantics path: f32 MXU operands, f32 elementwise, per-branch 2nd layer.
    out_f32 = anchor_encoder_pallas(anchor_b, params, embed_dim=embed_dim,
                                    feature_dim=feature_dim,
                                    matmul_dtype=jnp.float32, ew_dtype=jnp.float32,
                                    blockdiag_layer2=False)
    out_f32 = jax.block_until_ready(out_f32)
    assert out_f32.shape == (B, num_anchor, embed_dim)
    assert np.allclose(np.asarray(out_f32), ref, rtol=5e-3, atol=5e-3)

    # 2) Block-diagonal 2nd layer + MXU-grouped LayerNorm, still f32.
    out_bd = anchor_encoder_pallas(anchor_b, params, embed_dim=embed_dim,
                                   feature_dim=feature_dim,
                                   matmul_dtype=jnp.float32, ew_dtype=jnp.float32,
                                   blockdiag_layer2=True)
    out_bd = jax.block_until_ready(out_bd)
    assert np.allclose(np.asarray(out_bd), ref, rtol=5e-3, atol=5e-3)

    # 3) Default performance config: bf16 MXU operands, device-dependent
    #    elementwise dtype / second-layer layout. Loose smoke check.
    out_fast = anchor_encoder_pallas(anchor_b, params, embed_dim=embed_dim,
                                     feature_dim=feature_dim)
    out_fast = jax.block_until_ready(out_fast)
    assert np.allclose(np.asarray(out_fast), ref, rtol=0.1, atol=0.2)

    print("KERNEL_OK")
</pallas_src>

<mosaic_0001>
module attributes {stable_mosaic.version = 11 : i64} {
  func.func @_bcast_kernel(%arg0: i32, %arg1: memref<512x128xf32, #tpu.memory_space<vmem>>, %arg2: memref<1x512x128xf32, #tpu.memory_space<vmem>>) attributes {dimension_semantics = [#tpu.dimension_semantics<parallel>], iteration_bounds = array<i64: 2>, scalar_prefetch = 0 : i64, scratch_operands = 0 : i64, tpu.core_type = #tpu.core_type<tc>, window_params = [{pipeline_mode = #tpu.pipeline_mode<synchronous>, transform_indices = @transform_0, window_bounds = array<i64: 512, 128>}, {transform_indices = @transform_1, window_bounds = array<i64: 1, 512, 128>}]} {
    %c0 = arith.constant 0 : index
    %c0_0 = arith.constant 0 : index
    %0 = vector.load %arg1[%c0, %c0_0] : memref<512x128xf32, #tpu.memory_space<vmem>>, vector<512x128xf32>
    %c0_1 = arith.constant 0 : index
    %c0_2 = arith.constant 0 : index
    %c0_3 = arith.constant 0 : index
    %1 = vector.load %arg2[%c0_1, %c0_2, %c0_3] : memref<1x512x128xf32, #tpu.memory_space<vmem>>, vector<1x512x128xf32>
    %2 = vector.shape_cast %1 : vector<1x512x128xf32> to vector<512x128xf32>
    %3 = vector.shape_cast %0 : vector<512x128xf32> to vector<1x512x128xf32>
    tpu.vector_store %arg2[%c0_1, %c0_2, %c0_3], %3 {strides = array<i32>} : memref<1x512x128xf32, #tpu.memory_space<vmem>>, vector<1x512x128xf32>,
    return
  }
  func.func @transform_0(%arg0: i32) -> (i32, i32) {
    %c0_i32 = arith.constant 0 : i32
    %c0_i32_0 = arith.constant 0 : i32
    %c0_i32_1 = arith.constant 0 : i32
    return %c0_i32, %c0_i32_0 : i32, i32
  }
  func.func @transform_1(%arg0: i32) -> (i32, i32, i32) {
    %c0_i32 = arith.constant 0 : i32
    %c0_i32_0 = arith.constant 0 : i32
    %c0_i32_1 = arith.constant 0 : i32
    return %arg0, %c0_i32, %c0_i32_0 : i32, i32, i32
  }
}

</mosaic_0001>

<llo_original>
// kernel: tpu_custom_call.1
$region0: #{tpu_custom_call.1}
  #allocation0 [shape = 'u32[]', space=smem, size = 0x4, offset = 0x4, fixed_abs, tag = 'smem constant byte address 0x4 - core index']
  #allocation1 [shape = 'u32[144,128]{1,0:T(1,128)}', space=vmem, size = 0x12000, scoped, tag = 'internal scratch']
  %s0 = inlined_call_operand.hbm [shape: f32[512,128], index: 0, kind: input, shape index: {}]
  %s1 = inlined_call_operand.hbm [shape: f32[2,512,128], index: 1, kind: output, shape index: {}]
  %s2 = sld [smem:[#allocation0]]
  $region41: #{tpu_custom_call.1} parent=0
    _
  %s4 = ssub.s32 1, %s2
  %s5 = scalar_select 0, %s4, %s2
  $region1: #{tpu_custom_call.1} parent=0
    #allocation2 [shape = 'u8[262144]{0}', space=vmem, size = 0x40000, scoped, tag = 'input window, operand 0, single buffered']
    #allocation3 [shape = 's32[2]{0}', space=sflag, size = 0x8, scoped, tag = 'scoped memory for tpu_custom_call.1']
    #allocation4 [shape = 's32[2]{0}', space=sflag, size = 0x8, scoped, tag = 'scoped memory for tpu_custom_call.1']
    #allocation5 [shape = 'u8[524288]{0}', space=vmem, size = 0x80000, scoped, tag = 'output window, operand 0']
    %6 = vsyncpa [#allocation3], 0
    %7 = vsyncpa [#allocation4], 0
    %s8 = scalar_lea.sflag [#allocation4], 1
    %9 = vsyncpa %s8, 0
    loop: start=0, step=1, limit=4
    $region2: #{tpu_custom_call.1} parent=1 // loop_pre_header
      _
    $region3: #{tpu_custom_call.1} parent=1 // loop_header
      %s11 = sphi 0, %s15
      %p12 = scmp.ge.s32.totalorder %s11, 4
      %s19 = sphi 0, %s19
      %s21 = sphi 0, %s19
      %s22 = sphi 0, %s21
      %s36 = sphi 0, %s22
      %s42 = sphi 0, %s44
      %s45 = sphi 0, %s42
      %s46 = sphi 0, %s45
      %s62 = sphi 0, %s46
    $region4: #{tpu_custom_call.1} parent=1 // loop_header_branch
      %14 = sbr.rel (%p12) target = $region8
    $region5: #{tpu_custom_call.1} parent=1 // loop_body
      %s16 = ssub.s32 %s11, 1
      %s17 = ssub.s32 %s11, 2
      %s18 = sadd.s32 %s11, 1
      %s20 = sadd.s32 %s19, 1
      %p23 = scmp.eq.s32.totalorder %s11, 1
      %p24 = scmp.ne.s32.totalorder %s19, %s21
      %p25 = scmp.eq.s32.totalorder %s11, 0
      %p26 = por %p24, %p25
      %p27 = scmp.ne.s32.totalorder %s19, %s21
      %p28 = scmp.eq.s32.totalorder %s16, 1
      %p29 = por %p27, %p28
      %p30 = scmp.ne.s32.totalorder %s21, %s22
      %p31 = scmp.eq.s32.totalorder %s16, 0
      %p32 = por %p30, %p31
      %p33 = scmp.ne.s32.totalorder %s21, %s22
      %p34 = scmp.eq.s32.totalorder %s17, 1
      %p35 = por %p33, %p34
      %p37 = scmp.ne.s32.totalorder %s22, %s36
      %p38 = scmp.eq.s32.totalorder %s17, 0
      %p39 = por %p37, %p38
      %s40 = ssub.s32 %s11, %s18
      %p41 = scmp.eq.s32.totalorder %s40, 0
      %s43 = sadd.s32 %s42, 1
      %s44 = scalar_select %p41, %s42, %s43
      %p47 = pneg %p41
      %p48 = scmp.eq.s32.totalorder %s11, 1
      %p49 = por %p47, %p48
      %p50 = scmp.ne.s32.totalorder %s42, %s45
      %p51 = scmp.eq.s32.totalorder %s11, 0
      %p52 = por %p50, %p51
      %p53 = scmp.ne.s32.totalorder %s42, %s45
      %p54 = scmp.eq.s32.totalorder %s16, 1
      %p55 = por %p53, %p54
      %p56 = scmp.ne.s32.totalorder %s45, %s46
      %p57 = scmp.eq.s32.totalorder %s16, 0
      %p58 = por %p56, %p57
      %p59 = scmp.ne.s32.totalorder %s45, %s46
      %p60 = scmp.eq.s32.totalorder %s17, 1
      %p61 = por %p59, %p60
      %p63 = scmp.ne.s32.totalorder %s46, %s62
      %p64 = scmp.eq.s32.totalorder %s17, 0
      %p65 = por %p63, %p64
      %p66 = scmp.le.s32.totalorder 1, %s11
      %p67 = scmp.lt.s32.totalorder %s11, 3
      %p68 = pnand %p66, %p67
      %p69 = pneg %p68
      // Predicated region
      $region9: #{tpu_custom_call.1} parent=5 // pred_check
        _
      $region10: #{tpu_custom_call.1} parent=5 // pred_check_branch
        %71 = sbr.rel (%p68) target = $region12
      $region11: #{tpu_custom_call.1} parent=5 // pred_region
        %s72 = ssub.s32 %s11, 1
        // Predicated region
        $region13: #{tpu_custom_call.1} parent=11 // pred_check
          %p73 = pneg %p32
        $region14: #{tpu_custom_call.1} parent=11 // pred_check_branch
          %75 = sbr.rel (%p73) target = $region16
        $region15: #{tpu_custom_call.1} parent=11 // pred_region
          %s77 = ssub.s32 8192, 8192
          %78 = vsyncadd [#allocation3], %s77
          %s79 = sshll.u32 [#allocation2], 4
          %s80 = int_to_ptr.vmem [resolvable:$true] %s79
          %85 = dma.hbm_to_vmem [thread:$0]  %s0, 8192, %s80, [#allocation3], 128, 128, 8
        $region16: #{tpu_custom_call.1} parent=11 // pred_fallthru
          _
      $region12: #{tpu_custom_call.1} parent=5 // pred_fallthru
        _
      %p86 = scmp.lt.s32.totalorder %s11, 2
      // Predicated region
      $region17: #{tpu_custom_call.1} parent=5 // pred_check
        %p87 = pneg %p86
      $region18: #{tpu_custom_call.1} parent=5 // pred_check_branch
        %89 = sbr.rel (%p87) target = $region20
      $region19: #{tpu_custom_call.1} parent=5 // pred_region
        _
      $region20: #{tpu_custom_call.1} parent=5 // pred_fallthru
        _
      %p90 = scmp.le.s32.totalorder 1, %s11
      %p91 = scmp.lt.s32.totalorder %s11, 3
      %p92 = pnand %p90, %p91
      %p93 = pneg %p92
      // Predicated region
      $region21: #{tpu_custom_call.1} parent=5 // pred_check
        _
      $region22: #{tpu_custom_call.1} parent=5 // pred_check_branch
        %95 = sbr.rel (%p92) target = $region24
      $region23: #{tpu_custom_call.1} parent=5 // pred_region
        %s96 = ssub.s32 %s11, 1
        // Predicated region
        $region25: #{tpu_custom_call.1} parent=23 // pred_check
          %p97 = pneg %p32
        $region26: #{tpu_custom_call.1} parent=23 // pred_check_branch
          %99 = sbr.rel (%p97) target = $region28
        $region27: #{tpu_custom_call.1} parent=23 // pred_region
          %100 = dma.done [#allocation3], 8192
        $region28: #{tpu_custom_call.1} parent=23 // pred_fallthru
          _
        %p101 = pneg %p32
        %p102 = pneg %p29
        %p103 = pneg %p58
        %p104 = pneg %p55
        %s105 = sand.u32 %s45, 1
        %s106 = scalar_lea.sflag [#allocation4], %s105
        %s107 = sand.u32 %s45, 1
        %s108 = smul.addr %s107, 512
        %s109 = scalar_lea.vmem [#allocation5], %s108
        %v110 = vld [vmem:[#allocation2] sm:$0xff]
        %v111 = vld [vmem:[#allocation2 + $0x8] sm:$0xff]
        %v112 = vld [vmem:[#allocation2 + $0x10] sm:$0xff]
        %v113 = vld [vmem:[#allocation2 + $0x18] sm:$0xff]
        %v114 = vld [vmem:[#allocation2 + $0x20] sm:$0xff]
        %v115 = vld [vmem:[#allocation2 + $0x28] sm:$0xff]
        %v116 = vld [vmem:[#allocation2 + $0x30] sm:$0xff]
        %v117 = vld [vmem:[#allocation2 + $0x38] sm:$0xff]
        %v118 = vld [vmem:[#allocation2 + $0x40] sm:$0xff]
        %v119 = vld [vmem:[#allocation2 + $0x48] sm:$0xff]
        %v120 = vld [vmem:[#allocation2 + $0x50] sm:$0xff]
        %v121 = vld [vmem:[#allocation2 + $0x58] sm:$0xff]
        %v122 = vld [vmem:[#allocation2 + $0x60] sm:$0xff]
        %v123 = vld [vmem:[#allocation2 + $0x68] sm:$0xff]
        %v124 = vld [vmem:[#allocation2 + $0x70] sm:$0xff]
        %v125 = vld [vmem:[#allocation2 + $0x78] sm:$0xff]
        %v126 = vld [vmem:[#allocation2 + $0x80] sm:$0xff]
        %v127 = vld [vmem:[#allocation2 + $0x88] sm:$0xff]
        %v128 = vld [vmem:[#allocation2 + $0x90] sm:$0xff]
        %v129 = vld [vmem:[#allocation2 + $0x98] sm:$0xff]
        %v130 = vld [vmem:[#allocation2 + $0xa0] sm:$0xff]
        %v131 = vld [vmem:[#allocation2 + $0xa8] sm:$0xff]
        %v132 = vld [vmem:[#allocation2 + $0xb0] sm:$0xff]
        %v133 = vld [vmem:[#allocation2 + $0xb8] sm:$0xff]
        %v134 = vld [vmem:[#allocation2 + $0xc0] sm:$0xff]
        %v135 = vld [vmem:[#allocation2 + $0xc8] sm:$0xff]
        %v136 = vld [vmem:[#allocation2 + $0xd0] sm:$0xff]
        %v137 = vld [vmem:[#allocation2 + $0xd8] sm:$0xff]
        %v138 = vld [vmem:[#allocation2 + $0xe0] sm:$0xff]
        %v139 = vld [vmem:[#allocation2 + $0xe8] sm:$0xff]
        %v140 = vld [vmem:[#allocation2 + $0xf0] sm:$0xff]
        %v141 = vld [vmem:[#allocation2 + $0xf8] sm:$0xff]
        %v142 = vld [vmem:[#allocation2 + $0x100] sm:$0xff]
        %v143 = vld [vmem:[#allocation2 + $0x108] sm:$0xff]
        %v144 = vld [vmem:[#allocation2 + $0x110] sm:$0xff]
        %v145 = vld [vmem:[#allocation2 + $0x118] sm:$0xff]
        %v146 = vld [vmem:[#allocation2 + $0x120] sm:$0xff]
        %v147 = vld [vmem:[#allocation2 + $0x128] sm:$0xff]
        %v148 = vld [vmem:[#allocation2 + $0x130] sm:$0xff]
        %v149 = vld [vmem:[#allocation2 + $0x138] sm:$0xff]
        %v150 = vld [vmem:[#allocation2 + $0x140] sm:$0xff]
        %v151 = vld [vmem:[#allocation2 + $0x148] sm:$0xff]
        %v152 = vld [vmem:[#allocation2 + $0x150] sm:$0xff]
        %v153 = vld [vmem:[#allocation2 + $0x158] sm:$0xff]
        %v154 = vld [vmem:[#allocation2 + $0x160] sm:$0xff]
        %v155 = vld [vmem:[#allocation2 + $0x168] sm:$0xff]
        %v156 = vld [vmem:[#allocation2 + $0x170] sm:$0xff]
        %v157 = vld [vmem:[#allocation2 + $0x178] sm:$0xff]
        %v158 = vld [vmem:[#allocation2 + $0x180] sm:$0xff]
        %v159 = vld [vmem:[#allocation2 + $0x188] sm:$0xff]
        %v160 = vld [vmem:[#allocation2 + $0x190] sm:$0xff]
        %v161 = vld [vmem:[#allocation2 + $0x198] sm:$0xff]
        %v162 = vld [vmem:[#allocation2 + $0x1a0] sm:$0xff]
        %v163 = vld [vmem:[#allocation2 + $0x1a8] sm:$0xff]
        %v164 = vld [vmem:[#allocation2 + $0x1b0] sm:$0xff]
        %v165 = vld [vmem:[#allocation2 + $0x1b8] sm:$0xff]
        %v166 = vld [vmem:[#allocation2 + $0x1c0] sm:$0xff]
        %v167 = vld [vmem:[#allocation2 + $0x1c8] sm:$0xff]
        %v168 = vld [vmem:[#allocation2 + $0x1d0] sm:$0xff]
        %v169 = vld [vmem:[#allocation2 + $0x1d8] sm:$0xff]
        %v170 = vld [vmem:[#allocation2 + $0x1e0] sm:$0xff]
        %v171 = vld [vmem:[#allocation2 + $0x1e8] sm:$0xff]
        %v172 = vld [vmem:[#allocation2 + $0x1f0] sm:$0xff]
        %v173 = vld [vmem:[#allocation2 + $0x1f8] sm:$0xff]
        %174 = vst [vmem:[%s109] sm:$0xff] %v110
        %175 = vst [vmem:[%s109 + $0x8] sm:$0xff] %v111
        %176 = vst [vmem:[%s109 + $0x10] sm:$0xff] %v112
        %177 = vst [vmem:[%s109 + $0x18] sm:$0xff] %v113
        %178 = vst [vmem:[%s109 + $0x20] sm:$0xff] %v114
        %179 = vst [vmem:[%s109 + $0x28] sm:$0xff] %v115
        %180 = vst [vmem:[%s109 + $0x30] sm:$0xff] %v116
        %181 = vst [vmem:[%s109 + $0x38] sm:$0xff] %v117
        %182 = vst [vmem:[%s109 + $0x40] sm:$0xff] %v118
        %183 = vst [vmem:[%s109 + $0x48] sm:$0xff] %v119
        %184 = vst [vmem:[%s109 + $0x50] sm:$0xff] %v120
        %185 = vst [vmem:[%s109 + $0x58] sm:$0xff] %v121
        %186 = vst [vmem:[%s109 + $0x60] sm:$0xff] %v122
        %187 = vst [vmem:[%s109 + $0x68] sm:$0xff] %v123
        %188 = vst [vmem:[%s109 + $0x70] sm:$0xff] %v124
        %189 = vst [vmem:[%s109 + $0x78] sm:$0xff] %v125
        %190 = vst [vmem:[%s109 + $0x80] sm:$0xff] %v126
        %191 = vst [vmem:[%s109 + $0x88] sm:$0xff] %v127
        %192 = vst [vmem:[%s109 + $0x90] sm:$0xff] %v128
        %193 = vst [vmem:[%s109 + $0x98] sm:$0xff] %v129
        %194 = vst [vmem:[%s109 + $0xa0] sm:$0xff] %v130
        %195 = vst [vmem:[%s109 + $0xa8] sm:$0xff] %v131
        %196 = vst [vmem:[%s109 + $0xb0] sm:$0xff] %v132
        %197 = vst [vmem:[%s109 + $0xb8] sm:$0xff] %v133
        %198 = vst [vmem:[%s109 + $0xc0] sm:$0xff] %v134
        %199 = vst [vmem:[%s109 + $0xc8] sm:$0xff] %v135
        %200 = vst [vmem:[%s109 + $0xd0] sm:$0xff] %v136
        %201 = vst [vmem:[%s109 + $0xd8] sm:$0xff] %v137
        %202 = vst [vmem:[%s109 + $0xe0] sm:$0xff] %v138
        %203 = vst [vmem:[%s109 + $0xe8] sm:$0xff] %v139
        %204 = vst [vmem:[%s109 + $0xf0] sm:$0xff] %v140
        %205 = vst [vmem:[%s109 + $0xf8] sm:$0xff] %v141
        %206 = vst [vmem:[%s109 + $0x100] sm:$0xff] %v142
        %207 = vst [vmem:[%s109 + $0x108] sm:$0xff] %v143
        %208 = vst [vmem:[%s109 + $0x110] sm:$0xff] %v144
        %209 = vst [vmem:[%s109 + $0x118] sm:$0xff] %v145
        %210 = vst [vmem:[%s109 + $0x120] sm:$0xff] %v146
        %211 = vst [vmem:[%s109 + $0x128] sm:$0xff] %v147
        %212 = vst [vmem:[%s109 + $0x130] sm:$0xff] %v148
        %213 = vst [vmem:[%s109 + $0x138] sm:$0xff] %v149
        %214 = vst [vmem:[%s109 + $0x140] sm:$0xff] %v150
        %215 = vst [vmem:[%s109 + $0x148] sm:$0xff] %v151
        %216 = vst [vmem:[%s109 + $0x150] sm:$0xff] %v152
        %217 = vst [vmem:[%s109 + $0x158] sm:$0xff] %v153
        %218 = vst [vmem:[%s109 + $0x160] sm:$0xff] %v154
        %219 = vst [vmem:[%s109 + $0x168] sm:$0xff] %v155
        %220 = vst [vmem:[%s109 + $0x170] sm:$0xff] %v156
        %221 = vst [vmem:[%s109 + $0x178] sm:$0xff] %v157
        %222 = vst [vmem:[%s109 + $0x180] sm:$0xff] %v158
        %223 = vst [vmem:[%s109 + $0x188] sm:$0xff] %v159
        %224 = vst [vmem:[%s109 + $0x190] sm:$0xff] %v160
        %225 = vst [vmem:[%s109 + $0x198] sm:$0xff] %v161
        %226 = vst [vmem:[%s109 + $0x1a0] sm:$0xff] %v162
        %227 = vst [vmem:[%s109 + $0x1a8] sm:$0xff] %v163
        %228 = vst [vmem:[%s109 + $0x1b0] sm:$0xff] %v164
        %229 = vst [vmem:[%s109 + $0x1b8] sm:$0xff] %v165
        %230 = vst [vmem:[%s109 + $0x1c0] sm:$0xff] %v166
        %231 = vst [vmem:[%s109 + $0x1c8] sm:$0xff] %v167
        %232 = vst [vmem:[%s109 + $0x1d0] sm:$0xff] %v168
        %233 = vst [vmem:[%s109 + $0x1d8] sm:$0xff] %v169
        %234 = vst [vmem:[%s109 + $0x1e0] sm:$0xff] %v170
        %235 = vst [vmem:[%s109 + $0x1e8] sm:$0xff] %v171
        %236 = vst [vmem:[%s109 + $0x1f0] sm:$0xff] %v172
        %237 = vst [vmem:[%s109 + $0x1f8] sm:$0xff] %v173
        %s238 = sand.u32 %s45, 1
        %s239 = scalar_lea.sflag [#allocation4], %s238
        %s240 = sand.u32 %s45, 1
        %s241 = smul.addr %s240, 512
        %s242 = scalar_lea.vmem [#allocation5], %s241
        // Predicated region
        $region29: #{tpu_custom_call.1} parent=23 // pred_check
          %p243 = pneg %p55
        $region30: #{tpu_custom_call.1} parent=23 // pred_check_branch
          %245 = sbr.rel (%p243) target = $region32
        $region31: #{tpu_custom_call.1} parent=23 // pred_region
          %s247 = ssub.s32 8192, 8192
          %248 = vsyncadd %s239, %s247
          %s249 = smul.addr %s16, 64
          %s250 = smul.addr %s249, 128
          %s251 = scalar_lea.hbm %s1, %s250
          %s252 = sshll.u32 %s242, 4
          %s253 = int_to_ptr.vmem [resolvable:$true] %s252
          %258 = dma.vmem_to_hbm [thread:$0]  %s253, 8192, %s251, %s239, 128, 128, 8
        $region32: #{tpu_custom_call.1} parent=23 // pred_fallthru
          _
      $region24: #{tpu_custom_call.1} parent=5 // pred_fallthru
        _
      %p259 = scmp.le.s32.totalorder 2, %s11
      // Predicated region
      $region33: #{tpu_custom_call.1} parent=5 // pred_check
        %p260 = pneg %p259
      $region34: #{tpu_custom_call.1} parent=5 // pred_check_branch
        %262 = sbr.rel (%p260) target = $region36
      $region35: #{tpu_custom_call.1} parent=5 // pred_region
        %s263 = ssub.s32 %s11, 2
        // Predicated region
        $region37: #{tpu_custom_call.1} parent=35 // pred_check
          %p264 = pneg %p61
        $region38: #{tpu_custom_call.1} parent=35 // pred_check_branch
          %266 = sbr.rel (%p264) target = $region40
        $region39: #{tpu_custom_call.1} parent=35 // pred_region
          %s267 = sand.u32 %s46, 1
          %s268 = scalar_lea.sflag [#allocation4], %s267
          %s269 = sand.u32 %s46, 1
          %s270 = smul.addr %s269, 512
          %s271 = scalar_lea.vmem [#allocation5], %s270
          %272 = dma.done %s268, 8192
        $region40: #{tpu_custom_call.1} parent=35 // pred_fallthru
          _
      $region36: #{tpu_custom_call.1} parent=5 // pred_fallthru
        _
    $region6: #{tpu_custom_call.1} parent=1 // loop_footer
      %s15 = sadd.s32 1, %s11
    $region7: #{tpu_custom_call.1} parent=1 // loop_footer_branch
      %10 = sbr.rel target = $region3
    $region8: #{tpu_custom_call.1} parent=1 // loop_exit
      _
    %273 = vsyncpa [#allocation3], 1
    %s274 = scalar_lea.sflag [#allocation3], 1
    %275 = vsyncpa %s274, 1
    %276 = vsyncpa [#allocation4], 1
    %s277 = scalar_lea.sflag [#allocation4], 1
    %278 = vsyncpa %s277, 1

</llo_original>
